<compile_context>
chip_gen: v7x
topology: tpu7x:2x2x1
jax: 0.10.0
libtpu: 0.0.40
codegen_flags: <defaults>
</compile_context>

<pallas_src>
import functools

import jax
import jax.numpy as jnp
from jax.experimental import pallas as pl
from jax.experimental.pallas import tpu as pltpu


def _round_up(x, m):
    return ((x + m - 1) // m) * m


def _choose_tile_n(n, c):
    """Rows per tile: keep one f32 input tile <= ~1 MiB, multiple of 8, <= 1024."""
    rows_budget = max(8, (((1 << 20) // max(4 * c, 1)) // 8) * 8)
    tile = min(_round_up(n, 8), rows_budget, 1024)
    return max(tile, 8)


def _per_sample_loss(cdiff, r):
    """(tile_n, C) cumulative diff -> (tile_n, 1) per-sample EMD loss."""
    r_is_int = float(r) == int(r)
    if r_is_int and int(r) == 2:
        # Fast path (default): square on the VPU, one sqrt per row.
        m = jnp.mean(cdiff * cdiff, axis=-1, keepdims=True)
        return jnp.sqrt(m)
    if r_is_int and int(r) == 1:
        return jnp.mean(jnp.abs(cdiff), axis=-1, keepdims=True)
    if r_is_int and int(r) > 0:
        # Integer power lowers to repeated VPU multiplies; only the root is a pow.
        m = jnp.mean(jnp.abs(cdiff) ** int(r), axis=-1, keepdims=True)
        return m ** (1.0 / int(r))
    # Generic non-integer r: unavoidable exp/log path.
    rf = float(r)
    m = jnp.mean(jnp.abs(cdiff) ** rf, axis=-1, keepdims=True)
    return m ** (1.0 / rf)


def _emd_reduce_kernel(pred_ref, target_ref, tri_ref, out_ref, *,
                       r, reduction, loss_weight, n_valid, tile_n):
    i = pl.program_id(0)

    @pl.when(i == 0)
    def _init():
        out_ref[...] = jnp.zeros_like(out_ref)

    p = pred_ref[...].astype(jnp.float32)      # (tile_n, C)
    t = target_ref[...].astype(jnp.float32)
    d = p - t                                   # cumsum(p) - cumsum(t) == cumsum(p - t)

    # Cumulative difference along the bin axis via MXU matmul with resident U.
    cdiff = jnp.dot(d, tri_ref[...], preferred_element_type=jnp.float32)

    per_sample = _per_sample_loss(cdiff, r)     # (tile_n, 1)

    if n_valid % tile_n != 0:
        # Ragged last tile: rows past N hold undefined data -> zero them out.
        row = i * tile_n + jax.lax.broadcasted_iota(jnp.int32, per_sample.shape, 0)
        per_sample = jnp.where(row < n_valid, per_sample, 0.0)

    out_ref[...] += jnp.sum(per_sample, axis=0, keepdims=True)   # (1, 1) accumulator

    @pl.when(i == pl.num_programs(0) - 1)
    def _finalize():
        scale = float(loss_weight)
        if reduction == 'mean':
            scale = scale / float(n_valid)
        out_ref[...] = out_ref[...] * scale


def _emd_none_kernel(pred_ref, target_ref, tri_ref, out_ref, *, r, loss_weight):
    p = pred_ref[...].astype(jnp.float32)
    t = target_ref[...].astype(jnp.float32)
    d = p - t
    cdiff = jnp.dot(d, tri_ref[...], preferred_element_type=jnp.float32)
    per_sample = _per_sample_loss(cdiff, r)     # (tile_n, 1)
    out_ref[...] = per_sample * float(loss_weight)   # ragged tail clipped on writeback


def emd_loss_pallas(pred, target, *, loss_weight=1.0, r=2, reduction='mean',
                    weight=None, tile_n=None):
    """Pallas implementation of EMDLoss.forward for (N, C) inputs."""
    if reduction not in ('none', 'mean', 'sum'):
        raise ValueError(f'Unsupported reduction mode: {reduction}')
    if weight is not None:
        # TODO(synk): per-element weighting (weighted_loss with weight != None) not implemented.
        raise NotImplementedError('weight is not supported in this synthetic kernel')

    n, c = pred.shape
    if tile_n is None:
        tile_n = _choose_tile_n(n, c)
    else:
        tile_n = max(8, _round_up(int(tile_n), 8))
    num_tiles = pl.cdiv(n, tile_n)

    # Upper-triangular (incl. diag) ones matrix: U[k, j] = 1 if k <= j.
    # Built once in XLA; resident in VMEM across all grid steps.
    tri = jnp.triu(jnp.ones((c, c), jnp.float32))

    in_specs = [
        pl.BlockSpec((tile_n, c), lambda i: (i, 0)),
        pl.BlockSpec((tile_n, c), lambda i: (i, 0)),
        pl.BlockSpec((c, c), lambda i: (0, 0)),
    ]

    itemsize_in = jnp.dtype(pred.dtype).itemsize
    out_elems = n if reduction == 'none' else 1
    cost = pl.CostEstimate(
        flops=2 * n * c * c + 6 * n * c,
        transcendentals=n,
        bytes_accessed=2 * n * c * itemsize_in + c * c * 4 + out_elems * 4,
    )

    if reduction == 'none':
        kernel = functools.partial(_emd_none_kernel, r=r, loss_weight=loss_weight)
        out = pl.pallas_call(
            kernel,
            grid=(num_tiles,),
            out_shape=jax.ShapeDtypeStruct((n, 1), jnp.float32),
            in_specs=in_specs,
            out_specs=pl.BlockSpec((tile_n, 1), lambda i: (i, 0)),
            compiler_params=pltpu.CompilerParams(
                dimension_semantics=("parallel",)),
            cost_estimate=cost,
        )(pred, target, tri)
        return out[:, 0]                        # shape (N,)

    kernel = functools.partial(_emd_reduce_kernel, r=r, reduction=reduction,
                               loss_weight=loss_weight, n_valid=n, tile_n=tile_n)
    out = pl.pallas_call(
        kernel,
        grid=(num_tiles,),
        out_shape=jax.ShapeDtypeStruct((1, 1), jnp.float32),
        in_specs=in_specs,
        out_specs=pl.BlockSpec((1, 1), lambda i: (0, 0)),
        compiler_params=pltpu.CompilerParams(
            dimension_semantics=("arbitrary",)),
        cost_estimate=cost,
    )(pred, target, tri)
    return out[0, 0]                            # scalar


def _emd_loss_ref(pred, target, r=2, loss_weight=1.0, reduction='mean'):
    """Plain-JAX reference mirroring the PyTorch code."""
    loss = jnp.abs(jnp.cumsum(pred, axis=-1) - jnp.cumsum(target, axis=-1)) ** r
    loss = jnp.mean(loss, axis=-1) ** (1.0 / r)
    if reduction == 'mean':
        loss = jnp.mean(loss)
    elif reduction == 'sum':
        loss = jnp.sum(loss)
    return loss_weight * loss


if __name__ == '__main__':
    key = jax.random.PRNGKey(0)
    kp, kt = jax.random.split(key)

    # (a) Default usage: (N, C) score distributions, mean reduction, r=2.
    N, C = 8, 10
    pred = jax.nn.softmax(jax.random.normal(kp, (N, C), dtype=jnp.float32), axis=-1)
    target = jax.nn.softmax(jax.random.normal(kt, (N, C), dtype=jnp.float32), axis=-1)

    out = jax.block_until_ready(emd_loss_pallas(pred, target, loss_weight=1.0,
                                                r=2, reduction='mean'))
    ref = _emd_loss_ref(pred, target, r=2, reduction='mean')
    assert jnp.allclose(out, ref, rtol=1e-5, atol=1e-6), (out, ref)

    # (b) Multi-tile grid with ragged last tile + resident accumulator (sum).
    N2 = 37
    kp2, kt2 = jax.random.split(jax.random.PRNGKey(1))
    pred2 = jax.nn.softmax(jax.random.normal(kp2, (N2, C), dtype=jnp.float32), axis=-1)
    target2 = jax.nn.softmax(jax.random.normal(kt2, (N2, C), dtype=jnp.float32), axis=-1)
    out2 = jax.block_until_ready(emd_loss_pallas(pred2, target2, reduction='sum',
                                                 tile_n=16))
    ref2 = _emd_loss_ref(pred2, target2, r=2, reduction='sum')
    assert jnp.allclose(out2, ref2, rtol=1e-5, atol=1e-5), (out2, ref2)

    # (c) Per-sample losses (reduction='none'), with a non-unit loss_weight.
    out3 = jax.block_until_ready(emd_loss_pallas(pred, target, loss_weight=0.5,
                                                 reduction='none'))
    ref3 = _emd_loss_ref(pred, target, r=2, loss_weight=0.5, reduction='none')
    assert jnp.allclose(out3, ref3, rtol=1e-5, atol=1e-6), (out3, ref3)

    print("KERNEL_OK")
</pallas_src>

<mosaic_0001>
module attributes {stable_mosaic.version = 11 : i64} {
  func.func @_emd_reduce_kernel(%arg0: i32, %arg1: memref<8x10xf32, #tpu.memory_space<vmem>>, %arg2: memref<8x10xf32, #tpu.memory_space<vmem>>, %arg3: memref<10x10xf32, #tpu.memory_space<vmem>>, %arg4: memref<1x1xf32, #tpu.memory_space<vmem>>) attributes {dimension_semantics = [#tpu.dimension_semantics<arbitrary>], iteration_bounds = array<i64: 1>, scalar_prefetch = 0 : i64, scratch_operands = 0 : i64, tpu.core_type = #tpu.core_type<tc>, window_params = [{transform_indices = @transform_0, window_bounds = array<i64: 8, 10>}, {transform_indices = @transform_1, window_bounds = array<i64: 8, 10>}, {pipeline_mode = #tpu.pipeline_mode<synchronous>, transform_indices = @transform_2, window_bounds = array<i64: 10, 10>}, {pipeline_mode = #tpu.pipeline_mode<synchronous>, transform_indices = @transform_3, window_bounds = array<i64: 1, 1>}]} {
    %c0_i32 = arith.constant 0 : i32
    %0 = arith.cmpi eq, %arg0, %c0_i32 : i32
    %1 = arith.extui %0 : i1 to i32
    %c0_i32_0 = arith.constant 0 : i32
    %2 = arith.cmpi ne, %1, %c0_i32_0 : i32
    scf.if %2 {
      %cst_15 = arith.constant 0.000000e+00 : f32
      %22 = vector.broadcast %cst_15 : f32 to vector<1x1xf32>
      %c0_16 = arith.constant 0 : index
      %c0_17 = arith.constant 0 : index
      %23 = vector.load %arg4[%c0_16, %c0_17] : memref<1x1xf32, #tpu.memory_space<vmem>>, vector<1x1xf32>
      tpu.vector_store %arg4[%c0_16, %c0_17], %22 {strides = array<i32>} : memref<1x1xf32, #tpu.memory_space<vmem>>, vector<1x1xf32>,
    } else {
    }
    %c0 = arith.constant 0 : index
    %c0_1 = arith.constant 0 : index
    %3 = vector.load %arg1[%c0, %c0_1] : memref<8x10xf32, #tpu.memory_space<vmem>>, vector<8x10xf32>
    %c0_2 = arith.constant 0 : index
    %c0_3 = arith.constant 0 : index
    %4 = vector.load %arg2[%c0_2, %c0_3] : memref<8x10xf32, #tpu.memory_space<vmem>>, vector<8x10xf32>
    %5 = arith.subf %3, %4 : vector<8x10xf32>
    %c0_4 = arith.constant 0 : index
    %c0_5 = arith.constant 0 : index
    %6 = vector.load %arg3[%c0_4, %c0_5] : memref<10x10xf32, #tpu.memory_space<vmem>>, vector<10x10xf32>
    %cst = arith.constant dense<0.000000e+00> : vector<8x10xf32>
    %7 = tpu.matmul %5, %6, %cst {dimension_numbers = #tpu.dot_dimension_numbers<[1], [0], [0], [1], [0, 0, 1, 1], [], []>} : vector<8x10xf32>, vector<10x10xf32>, vector<8x10xf32> -> vector<8x10xf32>
    %8 = arith.mulf %7, %7 : vector<8x10xf32>
    %cst_6 = arith.constant dense<0.000000e+00> : vector<8xf32>
    %9 = vector.multi_reduction <add>, %8, %cst_6 [1] : vector<8x10xf32> to vector<8xf32>
    %10 = vector.shape_cast %9 : vector<8xf32> to vector<8x1xf32>
    %cst_7 = arith.constant 1.000000e+01 : f32
    %11 = vector.broadcast %cst_7 : f32 to vector<8x1xf32>
    %12 = arith.divf %10, %11 : vector<8x1xf32>
    %13 = math.sqrt %12 : vector<8x1xf32>
    %c0_8 = arith.constant 0 : index
    %c0_9 = arith.constant 0 : index
    %14 = vector.load %arg4[%c0_8, %c0_9] : memref<1x1xf32, #tpu.memory_space<vmem>>, vector<1x1xf32>
    %cst_10 = arith.constant dense<0.000000e+00> : vector<1xf32>
    %15 = vector.multi_reduction <add>, %13, %cst_10 [0] : vector<8x1xf32> to vector<1xf32>
    %16 = vector.shape_cast %15 : vector<1xf32> to vector<1x1xf32>
    %17 = arith.addf %14, %16 : vector<1x1xf32>
    %c0_11 = arith.constant 0 : index
    %c0_12 = arith.constant 0 : index
    %18 = vector.load %arg4[%c0_11, %c0_12] : memref<1x1xf32, #tpu.memory_space<vmem>>, vector<1x1xf32>
    tpu.vector_store %arg4[%c0_11, %c0_12], %17 {strides = array<i32>} : memref<1x1xf32, #tpu.memory_space<vmem>>, vector<1x1xf32>,
    %c0_i32_13 = arith.constant 0 : i32
    %19 = arith.cmpi eq, %arg0, %c0_i32_13 : i32
    %20 = arith.extui %19 : i1 to i32
    %c0_i32_14 = arith.constant 0 : i32
    %21 = arith.cmpi ne, %20, %c0_i32_14 : i32
    scf.if %21 {
      %c0_15 = arith.constant 0 : index
      %c0_16 = arith.constant 0 : index
      %22 = vector.load %arg4[%c0_15, %c0_16] : memref<1x1xf32, #tpu.memory_space<vmem>>, vector<1x1xf32>
      %cst_17 = arith.constant 1.250000e-01 : f32
      %23 = vector.broadcast %cst_17 : f32 to vector<1x1xf32>
      %24 = arith.mulf %22, %23 : vector<1x1xf32>
      %c0_18 = arith.constant 0 : index
      %c0_19 = arith.constant 0 : index
      %25 = vector.load %arg4[%c0_18, %c0_19] : memref<1x1xf32, #tpu.memory_space<vmem>>, vector<1x1xf32>
      tpu.vector_store %arg4[%c0_18, %c0_19], %24 {strides = array<i32>} : memref<1x1xf32, #tpu.memory_space<vmem>>, vector<1x1xf32>,
    } else {
    }
    return
  }
  func.func @transform_0(%arg0: i32) -> (i32, i32) {
    %c0_i32 = arith.constant 0 : i32
    %c0_i32_0 = arith.constant 0 : i32
    return %arg0, %c0_i32 : i32, i32
  }
  func.func @transform_1(%arg0: i32) -> (i32, i32) {
    %c0_i32 = arith.constant 0 : i32
    %c0_i32_0 = arith.constant 0 : i32
    return %arg0, %c0_i32 : i32, i32
  }
  func.func @transform_2(%arg0: i32) -> (i32, i32) {
    %c0_i32 = arith.constant 0 : i32
    %c0_i32_0 = arith.constant 0 : i32
    %c0_i32_1 = arith.constant 0 : i32
    return %c0_i32, %c0_i32_0 : i32, i32
  }
  func.func @transform_3(%arg0: i32) -> (i32, i32) {
    %c0_i32 = arith.constant 0 : i32
    %c0_i32_0 = arith.constant 0 : i32
    %c0_i32_1 = arith.constant 0 : i32
    return %c0_i32, %c0_i32_0 : i32, i32
  }
}

</mosaic_0001>

<llo_original>
// kernel: tpu_custom_call.1
$region0: #{tpu_custom_call.1}
  #allocation0 [shape = 'u32[]', space=smem, size = 0x4, offset = 0x4, fixed_abs, tag = 'smem constant byte address 0x4 - core index']
  #allocation1 [shape = 'u32[144,128]{1,0:T(1,128)}', space=vmem, size = 0x12000, scoped, tag = 'internal scratch']
  %s0 = inlined_call_operand.hbm [shape: f32[8,10], index: 0, kind: input, shape index: {}]
  %s1 = inlined_call_operand.hbm [shape: f32[8,10], index: 1, kind: input, shape index: {}]
  %s2 = inlined_call_operand.hbm [shape: f32[10,10], index: 2, kind: input, shape index: {}]
  %s3 = inlined_call_operand.hbm [shape: f32[1,1], index: 3, kind: output, shape index: {}]
  %s4 = sld [smem:[#allocation0]]
  $region42: #{tpu_custom_call.1} parent=0
    _
  %s6 = ssub.s32 1, %s4
  %s7 = scalar_select 0, %s6, %s4
  $region1: #{tpu_custom_call.1} parent=0
    #allocation2 [shape = 'u8[4096]{0}', space=vmem, size = 0x1000, scoped, tag = 'input window, operand 0, single buffered']
    #allocation3 [shape = 's32[1]{0}', space=sflag, size = 0x4, scoped, tag = 'scoped memory for tpu_custom_call.1']
    #allocation4 [shape = 's32[1]{0}', space=sflag, size = 0x4, scoped, tag = 'scoped memory for tpu_custom_call.1']
    #allocation5 [shape = 'u8[4096]{0}', space=vmem, size = 0x1000, scoped, tag = 'input window, operand 1, single buffered']
    #allocation6 [shape = 's32[1]{0}', space=sflag, size = 0x4, scoped, tag = 'scoped memory for tpu_custom_call.1']
    #allocation7 [shape = 'u8[8192]{0}', space=vmem, size = 0x2000, scoped, tag = 'input window, operand 2, single buffered']
    #allocation8 [shape = 'u8[512]{0}', space=vmem, size = 0x400, scoped, tag = 'output window, operand 0, single buffered']
    %8 = vsyncpa [#allocation3], 0
    %9 = vsyncpa [#allocation6], 0
    %10 = vsyncpa [#allocation4], 0
    // Predicated region
    $region2: #{tpu_custom_call.1} parent=1 // pred_check
      _
    $region3: #{tpu_custom_call.1} parent=1 // pred_check_branch
      %12 = sbr.rel (0) target = $region5
    $region4: #{tpu_custom_call.1} parent=1 // pred_region
      %s14 = ssub.s32 128, 128
      %15 = vsyncadd [#allocation3], %s14
      %s17 = sshll.u32 [#allocation2], 4
      %s18 = int_to_ptr.vmem [resolvable:$true] %s17
      %20 = dma.hbm_to_vmem [thread:$0]  %s0, 128, %s18, [#allocation3]
    $region5: #{tpu_custom_call.1} parent=1 // pred_fallthru
      _
    // Predicated region
    $region6: #{tpu_custom_call.1} parent=1 // pred_check
      _
    $region7: #{tpu_custom_call.1} parent=1 // pred_check_branch
      %22 = sbr.rel (0) target = $region9
    $region8: #{tpu_custom_call.1} parent=1 // pred_region
      %s24 = ssub.s32 128, 128
      %25 = vsyncadd [#allocation6], %s24
      %s27 = sshll.u32 [#allocation5], 4
      %s28 = int_to_ptr.vmem [resolvable:$true] %s27
      %30 = dma.hbm_to_vmem [thread:$0]  %s1, 128, %s28, [#allocation6]
    $region9: #{tpu_custom_call.1} parent=1 // pred_fallthru
      _
    // Predicated region
    $region10: #{tpu_custom_call.1} parent=1 // pred_check
      _
    $region11: #{tpu_custom_call.1} parent=1 // pred_check_branch
      %32 = sbr.rel (0) target = $region13
    $region12: #{tpu_custom_call.1} parent=1 // pred_region
      %s34 = ssub.s32 256, 256
      %35 = vsyncadd [#allocation6], %s34
      %s36 = sshll.u32 [#allocation7], 4
      %s37 = int_to_ptr.vmem [resolvable:$true] %s36
      %42 = dma.hbm_to_vmem [thread:$0]  %s2, 256, %s37, [#allocation6], 128, 128, 8
    $region13: #{tpu_custom_call.1} parent=1 // pred_fallthru
      _
    // Predicated region
    $region14: #{tpu_custom_call.1} parent=1 // pred_check
      _
    $region15: #{tpu_custom_call.1} parent=1 // pred_check_branch
      %44 = sbr.rel (0) target = $region17
    $region16: #{tpu_custom_call.1} parent=1 // pred_region
      %45 = dma.done [#allocation3], 128
    $region17: #{tpu_custom_call.1} parent=1 // pred_fallthru
      _
    // Predicated region
    $region18: #{tpu_custom_call.1} parent=1 // pred_check
      _
    $region19: #{tpu_custom_call.1} parent=1 // pred_check_branch
      %47 = sbr.rel (0) target = $region21
    $region20: #{tpu_custom_call.1} parent=1 // pred_region
      %48 = dma.done [#allocation6], 128
    $region21: #{tpu_custom_call.1} parent=1 // pred_fallthru
      _
    // Predicated region
    $region22: #{tpu_custom_call.1} parent=1 // pred_check
      _
    $region23: #{tpu_custom_call.1} parent=1 // pred_check_branch
      %50 = sbr.rel (0) target = $region25
    $region24: #{tpu_custom_call.1} parent=1 // pred_region
      %51 = dma.done [#allocation6], 256
    $region25: #{tpu_custom_call.1} parent=1 // pred_fallthru
      _
    %p52 = scmp.eq.s32.totalorder 0, 0
    // Predicated region
    $region26: #{tpu_custom_call.1} parent=1 // pred_check
      %p53 = pneg %p52
    $region27: #{tpu_custom_call.1} parent=1 // pred_check_branch
      %55 = sbr.rel (%p53) target = $region29
    $region28: #{tpu_custom_call.1} parent=1 // pred_region
      %vm56 = vcmask 0
      %57 = vst.msk [vmem:[#allocation8] sm:$0x1] %vm56, 0.0
    $region29: #{tpu_custom_call.1} parent=1 // pred_fallthru
      _
    %v58 = vld [vmem:[#allocation2] sm:$0xff]
    %v59 = vld [vmem:[#allocation5] sm:$0xff]
    %v60 = vsub.f32 %v58, %v59
    %v61 = vld [vmem:[#allocation7] sm:$0xff]
    %v62 = vld [vmem:[#allocation7 + $0x8] sm:$0x3]
    %vm63 = vcmask 80896
    %v65 = vsel %vm63, %v60, 0
    %vm67 = vcmask 1041408
    %v69 = vsel %vm67, %v62, 0
    %71 = vmatprep.subr.mxu0 0.0
    %72 = vmatpush1.msra.mxu0 %v61
    %73 = vmatprep.subr.mxu0 0.0
    %74 = vmatpush1.msra.mxu0 %v69
    %75 = vmatprep.subr.mxu0 0.0
    %76 = vmatpush1.msra.mxu0 0.0
    %77 = vmatprep.subr.mxu0 0.0
    %78 = vmatpush1.msra.mxu0 0.0
    %79 = vmatprep.subr.mxu0 0.0
    %80 = vmatpush1.msra.mxu0 0.0
    %81 = vmatprep.subr.mxu0 0.0
    %82 = vmatpush1.msra.mxu0 0.0
    %83 = vmatprep.subr.mxu0 0.0
    %84 = vmatpush1.msra.mxu0 0.0
    %85 = vmatprep.subr.mxu0 0.0
    %86 = vmatpush1.msra.mxu0 0.0
    %87 = vmatprep.subr.mxu0 0.0
    %88 = vmatpush1.msra.mxu0 0.0
    %89 = vmatprep.subr.mxu0 0.0
    %90 = vmatpush1.msra.mxu0 0.0
    %91 = vmatprep.subr.mxu0 0.0
    %92 = vmatpush1.msra.mxu0 0.0
    %93 = vmatprep.subr.mxu0 0.0
    %94 = vmatpush1.msra.mxu0 0.0
    %95 = vmatprep.subr.mxu0 0.0
    %96 = vmatpush1.msra.mxu0 0.0
    %97 = vmatprep.subr.mxu0 0.0
    %98 = vmatpush1.msra.mxu0 0.0
    %99 = vmatprep.subr.mxu0 0.0
    %100 = vmatpush1.msra.mxu0 0.0
    %101 = vmatprep.subr.mxu0 0.0
    %102 = vmatpush1.msra.mxu0 0.0
    %103 = vmatprep.subr.mxu0 0.0
    %104 = vmatpush1.msra.mxu0 0.0
    %105 = vmatprep.subr.mxu0 0.0
    %106 = vmatpush1.msra.mxu0 0.0
    %107 = vmatprep.subr.mxu0 0.0
    %108 = vmatpush1.msra.mxu0 0.0
    %109 = vmatprep.subr.mxu0 0.0
    %110 = vmatpush1.msra.mxu0 0.0
    %111 = vmatprep.subr.mxu0 0.0
    %112 = vmatpush1.msra.mxu0 0.0
    %113 = vmatprep.subr.mxu0 0.0
    %114 = vmatpush1.msra.mxu0 0.0
    %115 = vmatprep.subr.mxu0 0.0
    %116 = vmatpush1.msra.mxu0 0.0
    %117 = vmatprep.subr.mxu0 0.0
    %118 = vmatpush1.msra.mxu0 0.0
    %119 = vmatprep.subr.mxu0 0.0
    %120 = vmatpush1.msra.mxu0 0.0
    %121 = vmatprep.subr.mxu0 0.0
    %122 = vmatpush1.msra.mxu0 0.0
    %123 = vmatprep.subr.mxu0 0.0
    %124 = vmatpush1.msra.mxu0 0.0
    %125 = vmatprep.subr.mxu0 0.0
    %126 = vmatpush1.msra.mxu0 0.0
    %127 = vmatprep.subr.mxu0 0.0
    %128 = vmatpush1.msra.mxu0 0.0
    %129 = vmatprep.subr.mxu0 0.0
    %130 = vmatpush1.msra.mxu0 0.0
    %131 = vmatprep.subr.mxu0 0.0
    %132 = vmatpush1.msra.mxu0 0.0
    %133 = vmatprep.subr.mxu0 0.0
    %134 = vmatpush1.msra.mxu0 0.0
    %135 = vmatprep.mubr.f32.mxu0 0.0
    %136 = vmatmul.mubr.f32.gmra.mrb[0].mxu0 %v65
    %v137 = vpop.f32.mrb[0].mxu0
    %v138 = vadd.f32 0.0, %v137
    %v139 = vpop.f32.mrb[0].mxu0
    %140 = vdwg.mxu0
    %v141 = vmul.f32 %v138, %v138
    %v142 = vsel %vm63, %v141, 0.0
    %143 = vadd.xlane.f32.xlu0 %v142
    %v144 = vpop.xlane.xlu0 %143
    %v145 = vrcp.pop 10.0
    %v146 = vmul.f32 %v144, %v145
    %v147 = vrsqrt.pop %v146
    %v148 = vmul.f32 %v146, %v147
    %vm149 = vcmp.eq.f32.partialorder %v146, inf
    %v150 = vsel %vm149, %v146, %v148
    %vm151 = vcmp.eq.f32.partialorder %v146, 0.0
    %v152 = vand.u32 %v146, 2147483648
    %v153 = vsel %vm151, %v152, %v150
    %v154 = vld [vmem:[#allocation8] sm:$0x1]
    %v155 = vrot.slane %v153, 4
    %v156 = vadd.f32 %v153, %v155
    %v157 = vrot.slane %v156, 2
    %v158 = vadd.f32 %v156, %v157
    %v159 = vrot.slane %v158, 1
    %v160 = vadd.f32 %v158, %v159
    %v161 = vadd.f32 %v154, %v160
    %vm162 = vcmask 0
    %163 = vst.msk [vmem:[#allocation8] sm:$0x1] %vm162, %v161
    // Predicated region
    $region30: #{tpu_custom_call.1} parent=1 // pred_check
      %p164 = pneg %p52
    $region31: #{tpu_custom_call.1} parent=1 // pred_check_branch
      %166 = sbr.rel (%p164) target = $region33
    $region32: #{tpu_custom_call.1} parent=1 // pred_region
      %v167 = vld [vmem:[#allocation8] sm:$0x1]
      %v168 = vmul.f32 %v167, 0.125
      %169 = vst.msk [vmem:[#allocation8] sm:$0x1] %vm162, %v168
    $region33: #{tpu_custom_call.1} parent=1 // pred_fallthru
      _
    // Predicated region
    $region34: #{tpu_custom_call.1} parent=1 // pred_check
      _
    $region35: #{tpu_custom_call.1} parent=1 // pred_check_branch
      %171 = sbr.rel (0) target = $region37
    $region36: #{tpu_custom_call.1} parent=1 // pred_region
      %s173 = ssub.s32 16, 16
      %174 = vsyncadd [#allocation4], %s173
      %s176 = sshll.u32 [#allocation8], 4
      %s177 = int_to_ptr.vmem [resolvable:$true] %s176
      %179 = dma.vmem_to_hbm [thread:$0]  %s177, 16, %s3, [#allocation4]
    $region37: #{tpu_custom_call.1} parent=1 // pred_fallthru
      _
    // Predicated region
    $region38: #{tpu_custom_call.1} parent=1 // pred_check
      _
    $region39: #{tpu_custom_call.1} parent=1 // pred_check_branch
      %181 = sbr.rel (0) target = $region41
    $region40: #{tpu_custom_call.1} parent=1 // pred_region
      %182 = dma.done [#allocation4], 16
    $region41: #{tpu_custom_call.1} parent=1 // pred_fallthru
      _
    %183 = vsyncpa [#allocation3], 1
    %184 = vsyncpa [#allocation6], 1
    %185 = vsyncpa [#allocation4], 1

</llo_original>
